<compile_context>
chip_gen: v5e
topology: v5e:2x2
jax: 0.10.0
libtpu: 0.0.40
codegen_flags: <defaults>
</compile_context>

<pallas_src>
import numpy as np
import jax
import jax.numpy as jnp
from jax import lax
from jax.experimental import pallas as pl
from jax.experimental.pallas import tpu as pltpu

H = W = 4
NUM_CLASSES = 10
EPS = 1e-5                 # PyTorch BatchNorm default eps
LANES = 128                # lane-dense width of logits / softmax / output
NEG = -1e30                # mask value for the padded logit lanes
IN_FEAT = 1 * H * W        # 16
C1_FEAT = 2 * H * W        # 32  (conv_1 output, flattened)
C2_FEAT = 4 * H * W        # 64  (conv_2 output, flattened)
FC1_FEAT = 40
FC2_FEAT = 20


# ---------------------------------------------------------------------------
# Offline lowering (numpy): 2x2 conv with PyTorch padding='same' (pad right/
# bottom by 1) on the fixed 4x4 grid -> exact dense matrix so that
# flatten(conv(x)) == flatten(x) @ M.
# ---------------------------------------------------------------------------
def conv2x2_same_as_matrix(w, cin, cout, h, wd):
    w = np.asarray(w, dtype=np.float32)  # (cout, cin, 2, 2)
    M = np.zeros((cin * h * wd, cout * h * wd), dtype=np.float32)
    for co in range(cout):
        for ci in range(cin):
            for i in range(h):
                for j in range(wd):
                    for ki in range(2):
                        for kj in range(2):
                            ii, jj = i + ki, j + kj
                            if ii < h and jj < wd:  # zero pad on right/bottom
                                M[ci * h * wd + ii * wd + jj,
                                  co * h * wd + i * wd + j] += w[co, ci, ki, kj]
    return M


def fold_bn(gamma, beta, mean, var, bias, repeat=None):
    """Eval-mode BatchNorm + preceding-layer bias -> (scale, shift) vectors."""
    g, b = np.asarray(gamma, np.float32), np.asarray(beta, np.float32)
    m, v = np.asarray(mean, np.float32), np.asarray(var, np.float32)
    bi = np.asarray(bias, np.float32)
    s = g / np.sqrt(v + EPS)
    t = (bi - m) * s + b
    if repeat is not None:
        s, t = np.repeat(s, repeat), np.repeat(t, repeat)
    return s, t


def build_folded_params(p):
    """Fold conv->matmul + BN scales into matrices, cast to bf16, pack vectors."""
    s1, t1 = fold_bn(p['g1'], p['b1'], p['m1'], p['v1'], p['c1b'], repeat=H * W)
    s2, t2 = fold_bn(p['g2'], p['b2'], p['m2'], p['v2'], p['c2b'], repeat=H * W)
    s3, t3 = fold_bn(p['g3'], p['b3'], p['m3'], p['v3'], p['f1b'])
    s4, t4 = fold_bn(p['g4'], p['b4'], p['m4'], p['v4'], p['f2b'])

    # BN scales folded column-wise into the matmul matrices. Real (untrimmed)
    # shapes are kept -> ~20 KiB of weight DMA instead of ~324 KiB.
    m1 = conv2x2_same_as_matrix(p['c1w'], 1, 2, H, W) * s1[None, :]   # (16, 32)
    m2 = conv2x2_same_as_matrix(p['c2w'], 2, 4, H, W) * s2[None, :]   # (32, 64)
    w1 = np.asarray(p['f1w'], np.float32).T * s3[None, :]             # (64, 40)
    w2 = np.asarray(p['f2w'], np.float32).T * s4[None, :]             # (40, 20)
    # fc_3 output dim padded to 128 lanes so logits / softmax / store are
    # lane-dense (padded columns are exactly zero).
    w3 = np.zeros((FC2_FEAT, LANES), np.float32)                      # (20, 128)
    w3[:, :NUM_CLASSES] = np.asarray(p['f3w'], np.float32).T

    # All per-layer shift vectors + final (masked) bias in ONE (8,128) f32 tile.
    vec = np.zeros((8, LANES), np.float32)
    vec[0, :C1_FEAT] = t1
    vec[1, :C2_FEAT] = t2
    vec[2, :FC1_FEAT] = t3
    vec[3, :FC2_FEAT] = t4
    vec[4, :] = NEG                         # mask padded logit lanes for softmax
    vec[4, :NUM_CLASSES] = np.asarray(p['f3b'], np.float32)

    to_bf16 = lambda a: jnp.asarray(a, jnp.bfloat16)   # bf16 MXU operands
    return (to_bf16(m1), to_bf16(m2), to_bf16(w1), to_bf16(w2), to_bf16(w3),
            jnp.asarray(vec, jnp.float32))


# ---------------------------------------------------------------------------
# Pallas kernel: whole forward pass for one batch tile.
# ---------------------------------------------------------------------------
def net_kernel(x_ref, m1_ref, m2_ref, w1_ref, w2_ref, w3_ref, vec_ref, out_ref):
    vec = vec_ref[...]                       # (8,128) f32: shifts + masked bias
    t1 = vec[0:1, :C1_FEAT]
    t2 = vec[1:2, :C2_FEAT]
    t3 = vec[2:3, :FC1_FEAT]
    t4 = vec[3:4, :FC2_FEAT]
    b3 = vec[4:5, :]                         # fc_3 bias; padded lanes = -1e30

    # conv_1 + batch_norm_1 (folded) + relu    (bf16 MXU operands, f32 accum)
    h = jnp.dot(x_ref[...].astype(jnp.bfloat16), m1_ref[...],
                preferred_element_type=jnp.float32)
    h = jnp.maximum(h + t1, 0.0)
    # conv_2 + batch_norm_2 (folded) + relu
    h = jnp.dot(h.astype(jnp.bfloat16), m2_ref[...],
                preferred_element_type=jnp.float32)
    h = jnp.maximum(h + t2, 0.0)
    # fc_1 + batch_norm_3 + relu
    h = jnp.dot(h.astype(jnp.bfloat16), w1_ref[...],
                preferred_element_type=jnp.float32)
    h = jnp.maximum(h + t3, 0.0)
    # TODO(synk): functional.dropout(p=0.3) is stochastic (active even under
    # module.eval() since training defaults to True); implemented as identity
    # (inference path).
    # fc_2 + batch_norm_4 + relu
    h = jnp.dot(h.astype(jnp.bfloat16), w2_ref[...],
                preferred_element_type=jnp.float32)
    h = jnp.maximum(h + t4, 0.0)
    # fc_3 -> 128-lane padded logits; padded lanes carry -1e30 via the bias row
    logits = jnp.dot(h.astype(jnp.bfloat16), w3_ref[...],
                     preferred_element_type=jnp.float32) + b3
    # masked softmax with EXACT normalization (rows sum to 1 to f32 rounding)
    mx = jnp.max(logits, axis=1, keepdims=True)
    e = jnp.exp(logits - mx)                 # padded lanes underflow to exactly 0
    inv = 1.0 / jnp.sum(e, axis=1, keepdims=True)
    out_ref[...] = e * inv                   # lane-dense (tb, 128) store


def pallas_net_forward(x_flat, folded, block_rows=2048):
    m1, m2, w1, w2, w3, vec = folded
    n = x_flat.shape[0]

    # Batch tile: as large as allowed (amortize ~0.35us/step pipeline overhead),
    # but no larger than ceil(n/2) rounded up to a sublane multiple so that big
    # batches always yield >= 2 "parallel" grid steps (v7x dual-TC sharding).
    block_rows = max(8, (block_rows // 8) * 8)
    half8 = ((-(-n // 2)) + 7) // 8 * 8
    tb = max(8, min(block_rows, half8))
    steps = pl.cdiv(n, tb)   # ragged final block handled by Pallas edge masking

    const = lambda i: (0, 0)  # weights/vec: same block every step -> VMEM resident
    out = pl.pallas_call(
        net_kernel,
        out_shape=jax.ShapeDtypeStruct((n, LANES), jnp.float32),
        grid=(steps,),
        in_specs=[
            pl.BlockSpec((tb, IN_FEAT), lambda i: (i, 0)),
            pl.BlockSpec(m1.shape, const),
            pl.BlockSpec(m2.shape, const),
            pl.BlockSpec(w1.shape, const),
            pl.BlockSpec(w2.shape, const),
            pl.BlockSpec(w3.shape, const),
            pl.BlockSpec(vec.shape, const),
        ],
        out_specs=pl.BlockSpec((tb, LANES), lambda i: (i, 0)),
        compiler_params=pltpu.CompilerParams(
            dimension_semantics=("parallel",),
            vmem_limit_bytes=32 * 1024 * 1024),
    )(x_flat, m1, m2, w1, w2, w3, vec)
    return out[:, :NUM_CLASSES]   # drop padded softmax lanes (exactly 0)


# ---------------------------------------------------------------------------
# Pure-JAX f32 reference of the PyTorch forward (eval mode, dropout = identity).
# ---------------------------------------------------------------------------
def reference_forward(x_nchw, p):
    def conv(x, w, b):
        y = lax.conv_general_dilated(
            x, w, window_strides=(1, 1), padding=[(0, 1), (0, 1)],
            dimension_numbers=('NCHW', 'OIHW', 'NCHW'))
        return y + b[None, :, None, None]

    def bn2d(x, g, bt, m, v):
        return (x - m[None, :, None, None]) / jnp.sqrt(v[None, :, None, None] + EPS) \
            * g[None, :, None, None] + bt[None, :, None, None]

    def bn1d(x, g, bt, m, v):
        return (x - m) / jnp.sqrt(v + EPS) * g + bt

    h = jax.nn.relu(bn2d(conv(x_nchw, p['c1w'], p['c1b']),
                         p['g1'], p['b1'], p['m1'], p['v1']))
    h = jax.nn.relu(bn2d(conv(h, p['c2w'], p['c2b']),
                         p['g2'], p['b2'], p['m2'], p['v2']))
    h = h.reshape(h.shape[0], -1)
    h = jax.nn.relu(bn1d(h @ p['f1w'].T + p['f1b'], p['g3'], p['b3'], p['m3'], p['v3']))
    h = jax.nn.relu(bn1d(h @ p['f2w'].T + p['f2b'], p['g4'], p['b4'], p['m4'], p['v4']))
    logits = h @ p['f3w'].T + p['f3b']
    return jax.nn.softmax(logits, axis=1)


if __name__ == "__main__":
    ks = jax.random.split(jax.random.PRNGKey(0), 42)
    nrm = lambda k, shape, s=0.1: jax.random.normal(k, shape, jnp.float32) * s
    pos = lambda k, shape: jnp.abs(jax.random.normal(k, shape, jnp.float32)) * 0.5 + 0.5

    p = dict(
        c1w=nrm(ks[0], (2, 1, 2, 2)), c1b=nrm(ks[1], (2,)),
        g1=pos(ks[2], (2,)), b1=nrm(ks[3], (2,)), m1=nrm(ks[4], (2,)), v1=pos(ks[5], (2,)),
        c2w=nrm(ks[6], (4, 2, 2, 2)), c2b=nrm(ks[7], (4,)),
        g2=pos(ks[8], (4,)), b2=nrm(ks[9], (4,)), m2=nrm(ks[10], (4,)), v2=pos(ks[11], (4,)),
        f1w=nrm(ks[12], (40, 64)), f1b=nrm(ks[13], (40,)),
        g3=pos(ks[14], (40,)), b3=nrm(ks[15], (40,)), m3=nrm(ks[16], (40,)), v3=pos(ks[17], (40,)),
        f2w=nrm(ks[18], (20, 40)), f2b=nrm(ks[19], (20,)),
        g4=pos(ks[20], (20,)), b4=nrm(ks[21], (20,)), m4=nrm(ks[22], (20,)), v4=pos(ks[23], (20,)),
        f3w=nrm(ks[24], (NUM_CLASSES, 20)), f3b=nrm(ks[25], (NUM_CLASSES,)),
    )

    folded = build_folded_params(p)

    # --- check 1: batch=8, NCHW (N, 1, 4, 4) since fc_1 expects 4*4*4 features.
    x = jax.random.normal(ks[40], (8, 1, 4, 4), jnp.float32)
    out = jax.block_until_ready(pallas_net_forward(x.reshape(8, -1), folded))
    ref = reference_forward(x, p)
    assert out.shape == (8, NUM_CLASSES)
    # bf16 matmul operands (f32 accumulate) -> tolerance 2e-3 vs the f32 reference
    assert jnp.allclose(out, ref, atol=2e-3, rtol=2e-3), "mismatch vs reference"
    # softmax normalization is exact now -> rows sum to 1 to f32 rounding
    assert jnp.allclose(jnp.sum(out, axis=1), 1.0, atol=1e-4)

    # --- check 2: non-multiple batch, multi-step "parallel" grid, ragged last
    # block (no wrapper-side padding), default (large) batch tile.
    x2 = jax.random.normal(ks[41], (300, 1, 4, 4), jnp.float32)
    out2 = jax.block_until_ready(pallas_net_forward(x2.reshape(300, -1), folded))
    ref2 = reference_forward(x2, p)
    assert out2.shape == (300, NUM_CLASSES)
    assert jnp.allclose(out2, ref2, atol=2e-3, rtol=2e-3), "mismatch vs reference (tiled)"
    assert jnp.allclose(jnp.sum(out2, axis=1), 1.0, atol=1e-4)

    print("KERNEL_OK")
</pallas_src>

<mosaic_0001>
module attributes {stable_mosaic.version = 11 : i64} {
  func.func @net_kernel(%arg0: i32, %arg1: memref<8x16xf32, #tpu.memory_space<vmem>>, %arg2: memref<16x32xbf16, #tpu.memory_space<vmem>>, %arg3: memref<32x64xbf16, #tpu.memory_space<vmem>>, %arg4: memref<64x40xbf16, #tpu.memory_space<vmem>>, %arg5: memref<40x20xbf16, #tpu.memory_space<vmem>>, %arg6: memref<20x128xbf16, #tpu.memory_space<vmem>>, %arg7: memref<8x128xf32, #tpu.memory_space<vmem>>, %arg8: memref<8x128xf32, #tpu.memory_space<vmem>>) attributes {dimension_semantics = [#tpu.dimension_semantics<parallel>], iteration_bounds = array<i64: 1>, scalar_prefetch = 0 : i64, scratch_operands = 0 : i64, tpu.core_type = #tpu.core_type<tc>, window_params = [{transform_indices = @transform_0, window_bounds = array<i64: 8, 16>}, {pipeline_mode = #tpu.pipeline_mode<synchronous>, transform_indices = @transform_1, window_bounds = array<i64: 16, 32>}, {pipeline_mode = #tpu.pipeline_mode<synchronous>, transform_indices = @transform_2, window_bounds = array<i64: 32, 64>}, {pipeline_mode = #tpu.pipeline_mode<synchronous>, transform_indices = @transform_3, window_bounds = array<i64: 64, 40>}, {pipeline_mode = #tpu.pipeline_mode<synchronous>, transform_indices = @transform_4, window_bounds = array<i64: 40, 20>}, {pipeline_mode = #tpu.pipeline_mode<synchronous>, transform_indices = @transform_5, window_bounds = array<i64: 20, 128>}, {pipeline_mode = #tpu.pipeline_mode<synchronous>, transform_indices = @transform_6, window_bounds = array<i64: 8, 128>}, {transform_indices = @transform_7, window_bounds = array<i64: 8, 128>}]} {
    %c0 = arith.constant 0 : index
    %c0_0 = arith.constant 0 : index
    %0 = vector.load %arg7[%c0, %c0_0] : memref<8x128xf32, #tpu.memory_space<vmem>>, vector<8x128xf32>
    %1 = vector.extract_strided_slice %0 {offsets = [0, 0], sizes = [1, 32], strides = [1, 1]} : vector<8x128xf32> to vector<1x32xf32>
    %2 = vector.extract_strided_slice %0 {offsets = [1, 0], sizes = [1, 64], strides = [1, 1]} : vector<8x128xf32> to vector<1x64xf32>
    %3 = vector.extract_strided_slice %0 {offsets = [2, 0], sizes = [1, 40], strides = [1, 1]} : vector<8x128xf32> to vector<1x40xf32>
    %4 = vector.extract_strided_slice %0 {offsets = [3, 0], sizes = [1, 20], strides = [1, 1]} : vector<8x128xf32> to vector<1x20xf32>
    %5 = vector.extract_strided_slice %0 {offsets = [4, 0], sizes = [1, 128], strides = [1, 1]} : vector<8x128xf32> to vector<1x128xf32>
    %c0_1 = arith.constant 0 : index
    %c0_2 = arith.constant 0 : index
    %6 = vector.load %arg1[%c0_1, %c0_2] : memref<8x16xf32, #tpu.memory_space<vmem>>, vector<8x16xf32>
    %7 = arith.truncf %6 : vector<8x16xf32> to vector<8x16xbf16>
    %c0_3 = arith.constant 0 : index
    %c0_4 = arith.constant 0 : index
    %8 = vector.load %arg2[%c0_3, %c0_4] : memref<16x32xbf16, #tpu.memory_space<vmem>>, vector<16x32xbf16>
    %cst = arith.constant dense<0.000000e+00> : vector<8x32xf32>
    %9 = tpu.matmul %7, %8, %cst {dimension_numbers = #tpu.dot_dimension_numbers<[1], [0], [0], [1], [0, 0, 1, 1], [], []>} : vector<8x16xbf16>, vector<16x32xbf16>, vector<8x32xf32> -> vector<8x32xf32>
    %10 = vector.broadcast %1 : vector<1x32xf32> to vector<8x32xf32>
    %11 = arith.addf %9, %10 : vector<8x32xf32>
    %cst_5 = arith.constant 0.000000e+00 : f32
    %12 = vector.broadcast %cst_5 : f32 to vector<8x32xf32>
    %13 = arith.maximumf %11, %12 : vector<8x32xf32>
    %14 = arith.truncf %13 : vector<8x32xf32> to vector<8x32xbf16>
    %c0_6 = arith.constant 0 : index
    %c0_7 = arith.constant 0 : index
    %15 = vector.load %arg3[%c0_6, %c0_7] : memref<32x64xbf16, #tpu.memory_space<vmem>>, vector<32x64xbf16>
    %cst_8 = arith.constant dense<0.000000e+00> : vector<8x64xf32>
    %16 = tpu.matmul %14, %15, %cst_8 {dimension_numbers = #tpu.dot_dimension_numbers<[1], [0], [0], [1], [0, 0, 1, 1], [], []>} : vector<8x32xbf16>, vector<32x64xbf16>, vector<8x64xf32> -> vector<8x64xf32>
    %17 = vector.broadcast %2 : vector<1x64xf32> to vector<8x64xf32>
    %18 = arith.addf %16, %17 : vector<8x64xf32>
    %cst_9 = arith.constant 0.000000e+00 : f32
    %19 = vector.broadcast %cst_9 : f32 to vector<8x64xf32>
    %20 = arith.maximumf %18, %19 : vector<8x64xf32>
    %21 = arith.truncf %20 : vector<8x64xf32> to vector<8x64xbf16>
    %c0_10 = arith.constant 0 : index
    %c0_11 = arith.constant 0 : index
    %22 = vector.load %arg4[%c0_10, %c0_11] : memref<64x40xbf16, #tpu.memory_space<vmem>>, vector<64x40xbf16>
    %cst_12 = arith.constant dense<0.000000e+00> : vector<8x40xf32>
    %23 = tpu.matmul %21, %22, %cst_12 {dimension_numbers = #tpu.dot_dimension_numbers<[1], [0], [0], [1], [0, 0, 1, 1], [], []>} : vector<8x64xbf16>, vector<64x40xbf16>, vector<8x40xf32> -> vector<8x40xf32>
    %24 = vector.broadcast %3 : vector<1x40xf32> to vector<8x40xf32>
    %25 = arith.addf %23, %24 : vector<8x40xf32>
    %cst_13 = arith.constant 0.000000e+00 : f32
    %26 = vector.broadcast %cst_13 : f32 to vector<8x40xf32>
    %27 = arith.maximumf %25, %26 : vector<8x40xf32>
    %28 = arith.truncf %27 : vector<8x40xf32> to vector<8x40xbf16>
    %c0_14 = arith.constant 0 : index
    %c0_15 = arith.constant 0 : index
    %29 = vector.load %arg5[%c0_14, %c0_15] : memref<40x20xbf16, #tpu.memory_space<vmem>>, vector<40x20xbf16>
    %cst_16 = arith.constant dense<0.000000e+00> : vector<8x20xf32>
    %30 = tpu.matmul %28, %29, %cst_16 {dimension_numbers = #tpu.dot_dimension_numbers<[1], [0], [0], [1], [0, 0, 1, 1], [], []>} : vector<8x40xbf16>, vector<40x20xbf16>, vector<8x20xf32> -> vector<8x20xf32>
    %31 = vector.broadcast %4 : vector<1x20xf32> to vector<8x20xf32>
    %32 = arith.addf %30, %31 : vector<8x20xf32>
    %cst_17 = arith.constant 0.000000e+00 : f32
    %33 = vector.broadcast %cst_17 : f32 to vector<8x20xf32>
    %34 = arith.maximumf %32, %33 : vector<8x20xf32>
    %35 = arith.truncf %34 : vector<8x20xf32> to vector<8x20xbf16>
    %c0_18 = arith.constant 0 : index
    %c0_19 = arith.constant 0 : index
    %36 = vector.load %arg6[%c0_18, %c0_19] : memref<20x128xbf16, #tpu.memory_space<vmem>>, vector<20x128xbf16>
    %cst_20 = arith.constant dense<0.000000e+00> : vector<8x128xf32>
    %37 = tpu.matmul %35, %36, %cst_20 {dimension_numbers = #tpu.dot_dimension_numbers<[1], [0], [0], [1], [0, 0, 1, 1], [], []>} : vector<8x20xbf16>, vector<20x128xbf16>, vector<8x128xf32> -> vector<8x128xf32>
    %38 = vector.broadcast %5 : vector<1x128xf32> to vector<8x128xf32>
    %39 = arith.addf %37, %38 : vector<8x128xf32>
    %cst_21 = arith.constant dense<0xFF800000> : vector<8xf32>
    %40 = vector.multi_reduction <maximumf>, %39, %cst_21 [1] : vector<8x128xf32> to vector<8xf32>
    %41 = vector.shape_cast %40 : vector<8xf32> to vector<8x1xf32>
    %42 = vector.broadcast %41 : vector<8x1xf32> to vector<8x128xf32>
    %43 = arith.subf %39, %42 : vector<8x128xf32>
    %44 = math.exp %43 : vector<8x128xf32>
    %cst_22 = arith.constant dense<0.000000e+00> : vector<8xf32>
    %45 = vector.multi_reduction <add>, %44, %cst_22 [1] : vector<8x128xf32> to vector<8xf32>
    %46 = vector.shape_cast %45 : vector<8xf32> to vector<8x1xf32>
    %cst_23 = arith.constant 1.000000e+00 : f32
    %47 = vector.broadcast %cst_23 : f32 to vector<8x1xf32>
    %48 = arith.divf %47, %46 : vector<8x1xf32>
    %49 = vector.broadcast %48 : vector<8x1xf32> to vector<8x128xf32>
    %50 = arith.mulf %44, %49 : vector<8x128xf32>
    %c0_24 = arith.constant 0 : index
    %c0_25 = arith.constant 0 : index
    %51 = vector.load %arg8[%c0_24, %c0_25] : memref<8x128xf32, #tpu.memory_space<vmem>>, vector<8x128xf32>
    tpu.vector_store %arg8[%c0_24, %c0_25], %50 {strides = array<i32>} : memref<8x128xf32, #tpu.memory_space<vmem>>, vector<8x128xf32>,
    return
  }
  func.func @transform_0(%arg0: i32) -> (i32, i32) {
    %c0_i32 = arith.constant 0 : i32
    %c0_i32_0 = arith.constant 0 : i32
    return %arg0, %c0_i32 : i32, i32
  }
  func.func @transform_1(%arg0: i32) -> (i32, i32) {
    %c0_i32 = arith.constant 0 : i32
    %c0_i32_0 = arith.constant 0 : i32
    %c0_i32_1 = arith.constant 0 : i32
    return %c0_i32, %c0_i32_0 : i32, i32
  }
  func.func @transform_2(%arg0: i32) -> (i32, i32) {
    %c0_i32 = arith.constant 0 : i32
    %c0_i32_0 = arith.constant 0 : i32
    %c0_i32_1 = arith.constant 0 : i32
    return %c0_i32, %c0_i32_0 : i32, i32
  }
  func.func @transform_3(%arg0: i32) -> (i32, i32) {
    %c0_i32 = arith.constant 0 : i32
    %c0_i32_0 = arith.constant 0 : i32
    %c0_i32_1 = arith.constant 0 : i32
    return %c0_i32, %c0_i32_0 : i32, i32
  }
  func.func @transform_4(%arg0: i32) -> (i32, i32) {
    %c0_i32 = arith.constant 0 : i32
    %c0_i32_0 = arith.constant 0 : i32
    %c0_i32_1 = arith.constant 0 : i32
    return %c0_i32, %c0_i32_0 : i32, i32
  }
  func.func @transform_5(%arg0: i32) -> (i32, i32) {
    %c0_i32 = arith.constant 0 : i32
    %c0_i32_0 = arith.constant 0 : i32
    %c0_i32_1 = arith.constant 0 : i32
    return %c0_i32, %c0_i32_0 : i32, i32
  }
  func.func @transform_6(%arg0: i32) -> (i32, i32) {
    %c0_i32 = arith.constant 0 : i32
    %c0_i32_0 = arith.constant 0 : i32
    %c0_i32_1 = arith.constant 0 : i32
    return %c0_i32, %c0_i32_0 : i32, i32
  }
  func.func @transform_7(%arg0: i32) -> (i32, i32) {
    %c0_i32 = arith.constant 0 : i32
    %c0_i32_0 = arith.constant 0 : i32
    return %arg0, %c0_i32 : i32, i32
  }
}

</mosaic_0001>

<llo_original>
// kernel: tpu_custom_call.1
$region0: #{tpu_custom_call.1}
  #allocation0 [shape = 'u32[]', space=smem, size = 0x4, offset = 0x4, fixed_abs, tag = 'smem constant byte address 0x4 - core index']
  #allocation1 [shape = 'u32[72,128]{1,0:T(1,128)}', space=vmem, size = 0x9000, scoped, tag = 'internal scratch']
  %s0 = inlined_call_operand.vmem [shape: f32[8,16], index: 0, kind: input, shape index: {}]
  %s1 = inlined_call_operand.vmem [shape: bf16[16,32], index: 1, kind: input, shape index: {}]
  %s2 = inlined_call_operand.vmem [shape: bf16[32,64], index: 2, kind: input, shape index: {}]
  %s3 = inlined_call_operand.vmem [shape: bf16[64,40], index: 3, kind: input, shape index: {}]
  %s4 = inlined_call_operand.vmem [shape: bf16[40,20], index: 4, kind: input, shape index: {}]
  %s5 = inlined_call_operand.vmem [shape: bf16[20,128], index: 5, kind: input, shape index: {}]
  %s6 = inlined_call_operand.vmem [shape: f32[8,128], index: 6, kind: input, shape index: {}]
  %s7 = inlined_call_operand.hbm [shape: f32[8,128], index: 7, kind: output, shape index: {}]
  %s8 = sld [smem:[#allocation0]]
  $region38: #{tpu_custom_call.1} parent=0
    _
  %s10 = ssub.s32 1, %s8
  %s11 = scalar_select 0, %s10, %s8
  $region1: #{tpu_custom_call.1} parent=0
    #allocation2 [shape = 'u8[4096]{0}', space=vmem, size = 0x1000, scoped, tag = 'output window, operand 0, single buffered']
    #allocation3 [shape = 's32[1]{0}', space=sflag, size = 0x4, scoped, tag = 'scoped memory for tpu_custom_call.1']
    %12 = vsyncpa [#allocation3], 0
    // Predicated region
    $region2: #{tpu_custom_call.1} parent=1 // pred_check
      _
    $region3: #{tpu_custom_call.1} parent=1 // pred_check_branch
      %14 = sbr.rel (0) target = $region5
    $region4: #{tpu_custom_call.1} parent=1 // pred_region
      _
    $region5: #{tpu_custom_call.1} parent=1 // pred_fallthru
      _
    // Predicated region
    $region6: #{tpu_custom_call.1} parent=1 // pred_check
      _
    $region7: #{tpu_custom_call.1} parent=1 // pred_check_branch
      %16 = sbr.rel (0) target = $region9
    $region8: #{tpu_custom_call.1} parent=1 // pred_region
      _
    $region9: #{tpu_custom_call.1} parent=1 // pred_fallthru
      _
    // Predicated region
    $region10: #{tpu_custom_call.1} parent=1 // pred_check
      _
    $region11: #{tpu_custom_call.1} parent=1 // pred_check_branch
      %18 = sbr.rel (0) target = $region13
    $region12: #{tpu_custom_call.1} parent=1 // pred_region
      _
    $region13: #{tpu_custom_call.1} parent=1 // pred_fallthru
      _
    // Predicated region
    $region14: #{tpu_custom_call.1} parent=1 // pred_check
      _
    $region15: #{tpu_custom_call.1} parent=1 // pred_check_branch
      %20 = sbr.rel (0) target = $region17
    $region16: #{tpu_custom_call.1} parent=1 // pred_region
      _
    $region17: #{tpu_custom_call.1} parent=1 // pred_fallthru
      _
    // Predicated region
    $region18: #{tpu_custom_call.1} parent=1 // pred_check
      _
    $region19: #{tpu_custom_call.1} parent=1 // pred_check_branch
      %22 = sbr.rel (0) target = $region21
    $region20: #{tpu_custom_call.1} parent=1 // pred_region
      _
    $region21: #{tpu_custom_call.1} parent=1 // pred_fallthru
      _
    // Predicated region
    $region22: #{tpu_custom_call.1} parent=1 // pred_check
      _
    $region23: #{tpu_custom_call.1} parent=1 // pred_check_branch
      %24 = sbr.rel (0) target = $region25
    $region24: #{tpu_custom_call.1} parent=1 // pred_region
      _
    $region25: #{tpu_custom_call.1} parent=1 // pred_fallthru
      _
    // Predicated region
    $region26: #{tpu_custom_call.1} parent=1 // pred_check
      _
    $region27: #{tpu_custom_call.1} parent=1 // pred_check_branch
      %26 = sbr.rel (0) target = $region29
    $region28: #{tpu_custom_call.1} parent=1 // pred_region
      _
    $region29: #{tpu_custom_call.1} parent=1 // pred_fallthru
      _
    %v28 = vld [vmem:[%s6] sm:$0xff]
    %v29 = vld [vmem:[%s0] sm:$0xff]
    %v30 = vpack.c.bf16 %v29, %v29
    %v31 = vld [vmem:[%s1] sm:$0xf]
    %v32 = vld [vmem:[%s1 + $0x4] sm:$0xf]
    %v33 = vperm.slane %v28, 0
    %v36 = vunpack.c.l.b16 %v31
    %v37 = vunpack.c.l.b16 %v32
    %v38 = vpack.c.b16 %v37, %v36
    %vm40 = vcmask 130048
    %v42 = vsel %vm40, %v30, 0
    %44 = vmatpush.bf16.msra.mxu0 0
    %45 = vmatpush.bf16.msra.mxu0 0
    %46 = vmatpush.bf16.msra.mxu0 0
    %47 = vmatpush.bf16.msra.mxu0 0
    %48 = vmatpush.bf16.msra.mxu0 0
    %49 = vmatpush.bf16.msra.mxu0 0
    %50 = vmatpush.bf16.msra.mxu0 0
    %51 = vmatpush.bf16.msra.mxu0 %v38
    %52 = vmatmul.bf16.gmra.mxu0 %v42
    %v53 = vpop.f32.mrf.mxu0
    %v54 = vadd.f32 %v33, %v53
    %v55 = vpop.f32.mrf.mxu0
    %56 = vdwg.mxu0
    %v57 = vmax.f32 %v54, 0.0
    %v58 = vpack.c.bf16 %v57, %v57
    %v59 = vld [vmem:[%s2] sm:$0xf]
    %v60 = vld [vmem:[%s2 + $0x4] sm:$0xf]
    %v61 = vld [vmem:[%s2 + $0x8] sm:$0xf]
    %v62 = vld [vmem:[%s2 + $0xc] sm:$0xf]
    %v63 = vperm.slane %v28, 1
    %v68 = vunpack.c.l.b16 %v59
    %v69 = vunpack.c.l.b16 %v60
    %v70 = vunpack.c.l.b16 %v61
    %v71 = vunpack.c.l.b16 %v62
    %v72 = vpack.c.b16 %v69, %v68
    %v73 = vpack.c.b16 %v71, %v70
    %vm76 = vcmask 261120
    %v78 = vsel %vm76, %v58, 0
    %80 = vmatpush.bf16.msra.mxu0 0
    %81 = vmatpush.bf16.msra.mxu0 0
    %82 = vmatpush.bf16.msra.mxu0 0
    %83 = vmatpush.bf16.msra.mxu0 0
    %84 = vmatpush.bf16.msra.mxu0 0
    %85 = vmatpush.bf16.msra.mxu0 0
    %86 = vmatpush.bf16.msra.mxu0 %v73
    %87 = vmatpush.bf16.msra.mxu0 %v72
    %88 = vmatmul.bf16.gmra.mxu0 %v78
    %v89 = vpop.f32.mrf.mxu0
    %v90 = vadd.f32 %v63, %v89
    %v91 = vpop.f32.mrf.mxu0
    %92 = vdwg.mxu0
    %v93 = vmax.f32 %v90, 0.0
    %v94 = vpack.c.bf16 %v93, %v93
    %v95 = vld [vmem:[%s3] sm:$0xf]
    %v96 = vld [vmem:[%s3 + $0x4] sm:$0xf]
    %v97 = vld [vmem:[%s3 + $0x8] sm:$0xf]
    %v98 = vld [vmem:[%s3 + $0xc] sm:$0xf]
    %v99 = vld [vmem:[%s3 + $0x10] sm:$0xf]
    %v100 = vld [vmem:[%s3 + $0x14] sm:$0xf]
    %v101 = vld [vmem:[%s3 + $0x18] sm:$0xf]
    %v102 = vld [vmem:[%s3 + $0x1c] sm:$0xf]
    %v103 = vperm.slane %v28, 2
    %v112 = vunpack.c.l.b16 %v95
    %v113 = vunpack.c.l.b16 %v96
    %v114 = vunpack.c.l.b16 %v97
    %v115 = vunpack.c.l.b16 %v98
    %v116 = vunpack.c.l.b16 %v99
    %v117 = vunpack.c.l.b16 %v100
    %v118 = vunpack.c.l.b16 %v101
    %v119 = vunpack.c.l.b16 %v102
    %v120 = vpack.c.b16 %v113, %v112
    %v121 = vpack.c.b16 %v115, %v114
    %v122 = vpack.c.b16 %v117, %v116
    %v123 = vpack.c.b16 %v119, %v118
    %vm128 = vcmask 523264
    %v130 = vsel %vm128, %v94, 0
    %132 = vmatpush.bf16.msra.mxu0 0
    %133 = vmatpush.bf16.msra.mxu0 0
    %134 = vmatpush.bf16.msra.mxu0 0
    %135 = vmatpush.bf16.msra.mxu0 0
    %136 = vmatpush.bf16.msra.mxu0 %v123
    %137 = vmatpush.bf16.msra.mxu0 %v122
    %138 = vmatpush.bf16.msra.mxu0 %v121
    %139 = vmatpush.bf16.msra.mxu0 %v120
    %140 = vmatmul.bf16.gmra.mxu0 %v130
    %v141 = vpop.f32.mrf.mxu0
    %v142 = vadd.f32 %v103, %v141
    %v143 = vpop.f32.mrf.mxu0
    %144 = vdwg.mxu0
    %v145 = vmax.f32 %v142, 0.0
    %v146 = vpack.c.bf16 %v145, %v145
    %v147 = vld [vmem:[%s4] sm:$0xf]
    %v148 = vld [vmem:[%s4 + $0x4] sm:$0xf]
    %v149 = vld [vmem:[%s4 + $0x8] sm:$0xf]
    %v150 = vld [vmem:[%s4 + $0xc] sm:$0xf]
    %v151 = vld [vmem:[%s4 + $0x10] sm:$0xf]
    %v152 = vperm.slane %v28, 3
    %v158 = vunpack.c.l.b16 %v147
    %v159 = vunpack.c.l.b16 %v148
    %v160 = vunpack.c.l.b16 %v149
    %v161 = vunpack.c.l.b16 %v150
    %v162 = vunpack.c.l.b16 %v151
    %v163 = vpack.c.b16 %v159, %v158
    %v164 = vpack.c.b16 %v161, %v160
    %v165 = vpack.c.b16 %v162, %v162
    %vm168 = vcmask 326656
    %v170 = vsel %vm168, %v146, 0
    %vm172 = vcmask 1043456
    %v174 = vsel %vm172, %v165, 0
    %176 = vmatpush.bf16.msra.mxu0 0
    %177 = vmatpush.bf16.msra.mxu0 0
    %178 = vmatpush.bf16.msra.mxu0 0
    %179 = vmatpush.bf16.msra.mxu0 0
    %180 = vmatpush.bf16.msra.mxu0 0
    %181 = vmatpush.bf16.msra.mxu0 %v174
    %182 = vmatpush.bf16.msra.mxu0 %v164
    %183 = vmatpush.bf16.msra.mxu0 %v163
    %184 = vmatmul.bf16.gmra.mxu0 %v170
    %v185 = vpop.f32.mrf.mxu0
    %v186 = vadd.f32 %v152, %v185
    %v187 = vpop.f32.mrf.mxu0
    %188 = vdwg.mxu0
    %v189 = vmax.f32 %v186, 0.0
    %v190 = vpack.c.bf16 %v189, %v189
    %v191 = vld [vmem:[%s5] sm:$0xf]
    %v192 = vld [vmem:[%s5 + $0x4] sm:$0xf]
    %v193 = vld [vmem:[%s5 + $0x8] sm:$0x3]
    %v194 = vperm.slane %v28, 4
    %v198 = vunpack.c.l.b16 %v191
    %v199 = vunpack.c.l.b16 %v192
    %v200 = vunpack.c.l.b16 %v193
    %v201 = vpack.c.b16 %v199, %v198
    %v202 = vpack.c.b16 %v200, %v200
    %vm204 = vcmask 162816
    %v206 = vsel %vm204, %v190, 0
    %vm208 = vcmask 1041408
    %v210 = vsel %vm208, %v202, 0
    %212 = vmatpush.bf16.msra.mxu0 0
    %213 = vmatpush.bf16.msra.mxu0 0
    %214 = vmatpush.bf16.msra.mxu0 0
    %215 = vmatpush.bf16.msra.mxu0 0
    %216 = vmatpush.bf16.msra.mxu0 0
    %217 = vmatpush.bf16.msra.mxu0 0
    %218 = vmatpush.bf16.msra.mxu0 %v210
    %219 = vmatpush.bf16.msra.mxu0 %v201
    %220 = vmatmul.bf16.gmra.mxu0 %v206
    %v221 = vpop.f32.mrf.mxu0
    %v222 = vadd.f32 %v194, %v221
    %v223 = vpop.f32.mrf.mxu0
    %224 = vdwg.mxu0
    %225 = vmax.xlane.f32.xlu0 %v222
    %v226 = vpop.xlane.xlu0 %225
    %v227 = vsub.f32 %v222, %v226
    %v228 = vmul.f32 %v227, 1.442695
    %v229 = vpow.pop %v228
    %230 = vadd.xlane.f32.xlu0 %v229
    %v231 = vpop.xlane.xlu0 %230
    %v232 = vrcp.pop %v231
    %v233 = vmul.f32 %v231, %v232
    %v234 = vsub.f32 1.0, %v233
    %v235 = vmul.f32 %v232, %v234
    %v236 = vadd.f32 %v232, %v235
    %vm237 = vweird.f32 %v231
    %vm238 = vweird.f32 %v232
    %vm239 = vmor %vm237, %vm238
    %v240 = vsel %vm239, %v232, %v236
    %v241 = vand.u32 2147483647, %v231
    %vm242 = vcmp.eq.f32.partialorder %v241, 8.507059e+37
    %v243 = vand.u32 %v231, 2147483648
    %v244 = vor.u32 1.1754944e-38, %v243
    %v245 = vsel %vm242, %v244, %v240
    %v246 = vmul.f32 1.0, %v245
    %v247 = vmul.f32 %v229, %v246
    %248 = vst [vmem:[#allocation2] sm:$0xff] %v247
    // Predicated region
    $region30: #{tpu_custom_call.1} parent=1 // pred_check
      _
    $region31: #{tpu_custom_call.1} parent=1 // pred_check_branch
      %250 = sbr.rel (0) target = $region33
    $region32: #{tpu_custom_call.1} parent=1 // pred_region
      %252 = vsyncadd [#allocation3], 0
      %s254 = sshll.u32 [#allocation2], 4
      %s255 = int_to_ptr.vmem [resolvable:$true] %s254
      %s256 = sshll.u32 %s7, 4
      %s257 = int_to_ptr.hbm [resolvable:$true] %s256
      %259 = dma.vmem_to_hbm [thread:$0]  %s255, 128, %s257, [#allocation3]
    $region33: #{tpu_custom_call.1} parent=1 // pred_fallthru
      _
    // Predicated region
    $region34: #{tpu_custom_call.1} parent=1 // pred_check
      _
    $region35: #{tpu_custom_call.1} parent=1 // pred_check_branch
      %261 = sbr.rel (0) target = $region37
    $region36: #{tpu_custom_call.1} parent=1 // pred_region
      %263 = dma.done [#allocation3], 128
    $region37: #{tpu_custom_call.1} parent=1 // pred_fallthru
      _
    %264 = vsyncpa [#allocation3], 1

</llo_original>
